<compile_context>
chip_gen: v5e
topology: v5e:2x2
jax: 0.10.0
libtpu: 0.0.40
codegen_flags: <defaults>
</compile_context>

<pallas_src>
import functools

import jax
import jax.numpy as jnp
from jax.experimental import pallas as pl
from jax.experimental.pallas import tpu as pltpu

BN_EPS = 1e-5
LEAKY_SLOPE = 0.2


def _round_up(x, m):
    return ((x + m - 1) // m) * m


def _leaky_relu(x, slope):
    return jnp.where(x >= 0, x, slope * x)


# -----------------------------------------------------------------------------
# Kernel: three MXU matmuls + bias + LeakyReLU, BN already folded into weights.
# -----------------------------------------------------------------------------
def disc_kernel(x_ref, w1_ref, b1_ref, w2_ref, b2_ref, w3_ref, b3_ref, o_ref):
    cdt = w1_ref.dtype  # compute dtype for matmul operands (f32 or bf16)

    # Cast x in-kernel (VPU, hidden under the DMA) instead of a wrapper-side
    # XLA pad/cast pass over x in HBM.
    x = x_ref[...].astype(cdt)

    # ---- block 1: folded Linear+BN -> LeakyReLU (f32 accumulation on MXU) ----
    h = jnp.dot(x, w1_ref[...], preferred_element_type=jnp.float32)
    h = _leaky_relu(h + b1_ref[...], LEAKY_SLOPE).astype(cdt)

    # ---- block 2: folded Linear+BN -> LeakyReLU ----
    h = jnp.dot(h, w2_ref[...], preferred_element_type=jnp.float32)
    h = _leaky_relu(h + b2_ref[...], LEAKY_SLOPE).astype(cdt)

    # ---- head: Linear(hid -> out_dim) ----
    o = jnp.dot(h, w3_ref[...], preferred_element_type=jnp.float32) + b3_ref[...]
    o_ref[...] = o.astype(o_ref.dtype)


# -----------------------------------------------------------------------------
# VMEM cap: generation-aware (v7x: ~54 MiB of 64; v5e/v6e: 100 MiB of 128).
# -----------------------------------------------------------------------------
def _vmem_cap_bytes():
    try:
        phys = pltpu.get_tpu_info().vmem_capacity_bytes
    except Exception:
        phys = 64 * 1024 * 1024  # conservative (v7x-sized) fallback
    return int(min(int(0.85 * phys), 100 * 1024 * 1024))


# -----------------------------------------------------------------------------
# Wrapper
# -----------------------------------------------------------------------------
@functools.partial(
    jax.jit, static_argnames=("out_dim", "block_b", "single_buffer_weights"))
def _discriminator_forward(x, params, out_dim, block_b, single_buffer_weights):
    B, in_dim = x.shape
    w1, b1 = params["w1"], params["b1"]
    w2, b2 = params["w2"], params["b2"]
    w3, b3 = params["w3"], params["b3"]

    assert w1.shape[0] == in_dim, "w1 rows must match x feature dim (unpadded)"
    hid_p = w1.shape[1]
    out_p = w3.shape[1]
    cdt = w1.dtype

    # Batch tiling: one grid step for small batches (no forced split on 1-TC
    # chips); 512-row lane-dense tiles + cdiv grid for large batches (partial
    # last tile is masked on store, so no batch padding is materialized).
    bb = B if B <= block_b else block_b
    grid = (pl.cdiv(B, bb),)

    wb = jnp.dtype(cdt).itemsize
    xb = jnp.dtype(x.dtype).itemsize
    w_bufs = 1 if single_buffer_weights else 2
    weight_bytes = ((in_dim * hid_p + hid_p * hid_p + hid_p * out_p) * wb
                    + (2 * hid_p + out_p) * 4)

    # VMEM budget: pipelined x/out tiles, resident weights, plus the in-kernel
    # intermediates (f32 accumulators + compute-dtype copies + cast x tile).
    vmem_est = (
        2 * bb * in_dim * xb            # x tile, double-buffered
        + 2 * bb * out_p * wb           # out tile, double-buffered
        + w_bufs * weight_bytes         # resident weights/biases
        + 2 * bb * hid_p * (4 + wb)     # two hidden activations (f32 + cdt)
        + bb * in_dim * wb              # in-kernel cast copy of x tile
    )
    vmem_limit = int(min(max(int(1.5 * vmem_est), 16 * 1024 * 1024),
                         _vmem_cap_bytes()))

    flops = 2 * B * (in_dim * hid_p + hid_p * hid_p + hid_p * out_p)
    bytes_accessed = B * in_dim * xb + weight_bytes + B * out_p * wb
    cost = pl.CostEstimate(flops=int(flops), transcendentals=0,
                           bytes_accessed=int(bytes_accessed))

    def wspec(shape):
        # Constant-index (grid-resident) operands: request single buffering.
        if single_buffer_weights:
            return pl.BlockSpec(shape, lambda i: (0,) * len(shape),
                                pipeline_mode=pl.Buffered(1))
        return pl.BlockSpec(shape, lambda i: (0,) * len(shape))

    out = pl.pallas_call(
        disc_kernel,
        out_shape=jax.ShapeDtypeStruct((B, out_p), cdt),
        grid_spec=pltpu.PrefetchScalarGridSpec(
            num_scalar_prefetch=0,
            grid=grid,
            in_specs=[
                pl.BlockSpec((bb, in_dim), lambda i: (i, 0)),  # x tile (unpadded)
                wspec((in_dim, hid_p)), wspec((1, hid_p)),     # folded w1', b1'
                wspec((hid_p, hid_p)), wspec((1, hid_p)),      # folded w2', b2'
                wspec((hid_p, out_p)), wspec((1, out_p)),      # w3,  b3
            ],
            out_specs=pl.BlockSpec((bb, out_p), lambda i: (i, 0)),
        ),
        compiler_params=pltpu.CompilerParams(
            dimension_semantics=("parallel",),
            vmem_limit_bytes=vmem_limit,
        ),
        cost_estimate=cost,
    )(x, w1, b1, w2, b2, w3, b3)

    return out[:, :out_dim]


def discriminator_forward(x, params, out_dim, block_b=512):
    try:
        return _discriminator_forward(x, params, out_dim, block_b, True)
    except Exception:
        # TODO(synk): pl.Buffered(1) pipeline_mode unsupported on this build;
        # fall back to default (double-buffered) weight specs.
        return _discriminator_forward(x, params, out_dim, block_b, False)


# -----------------------------------------------------------------------------
# Parameter preparation: fold eval-mode BN into the Linears, pad hid/out lanes.
# -----------------------------------------------------------------------------
def prepare_params(raw, compute_dtype=jnp.bfloat16):
    def fold(w, b, g, be, rm, rv):
        scale = g / jnp.sqrt(rv + BN_EPS)          # (1, hid)
        return w * scale, (b - rm) * scale + be    # per-output-column fold

    w1, b1 = fold(raw["w1"], raw["b1"], raw["g1"], raw["be1"], raw["rm1"], raw["rv1"])
    w2, b2 = fold(raw["w2"], raw["b2"], raw["g2"], raw["be2"], raw["rm2"], raw["rv2"])
    w3, b3 = raw["w3"], raw["b3"]

    in_dim, hid = w1.shape
    out_dim = w3.shape[1]
    hid_p = _round_up(hid, 128)
    out_p = _round_up(out_dim, 128)

    def padw(w, r, c):
        return jnp.pad(w, ((0, r - w.shape[0]), (0, c - w.shape[1])))

    def padb(b, c):
        return jnp.pad(b, ((0, 0), (0, c - b.shape[1])))

    return {
        # w1 keeps its real in_dim rows so x needs no feature padding/copy.
        "w1": padw(w1, in_dim, hid_p).astype(compute_dtype),
        "b1": padb(b1, hid_p).astype(jnp.float32),
        "w2": padw(w2, hid_p, hid_p).astype(compute_dtype),
        "b2": padb(b2, hid_p).astype(jnp.float32),
        "w3": padw(w3, hid_p, out_p).astype(compute_dtype),
        "b3": padb(b3, out_p).astype(jnp.float32),
    }


# -----------------------------------------------------------------------------
# Test harness: raw (unfolded) params + pure-JAX reference.
# -----------------------------------------------------------------------------
def init_params(key, in_dim, hid, out_dim, dtype=jnp.float32):
    ks = jax.random.split(key, 14)
    row = lambda k, n, scale=1.0: (scale * jax.random.normal(k, (1, n))).astype(dtype)
    return {
        "w1": (jax.random.normal(ks[0], (in_dim, hid)) / jnp.sqrt(in_dim)).astype(dtype),
        "b1": row(ks[1], hid, 0.1),
        "g1": (1.0 + 0.1 * jax.random.normal(ks[2], (1, hid))).astype(dtype),
        "be1": row(ks[3], hid, 0.1),
        "rm1": row(ks[4], hid, 0.05),
        "rv1": (1.0 + 0.1 * jnp.abs(jax.random.normal(ks[5], (1, hid)))).astype(dtype),
        "w2": (jax.random.normal(ks[6], (hid, hid)) / jnp.sqrt(hid)).astype(dtype),
        "b2": row(ks[7], hid, 0.1),
        "g2": (1.0 + 0.1 * jax.random.normal(ks[8], (1, hid))).astype(dtype),
        "be2": row(ks[9], hid, 0.1),
        "rm2": row(ks[10], hid, 0.05),
        "rv2": (1.0 + 0.1 * jnp.abs(jax.random.normal(ks[11], (1, hid)))).astype(dtype),
        "w3": (jax.random.normal(ks[12], (hid, out_dim)) / jnp.sqrt(hid)).astype(dtype),
        "b3": row(ks[13], out_dim, 0.1),
    }


def reference_forward(x, p):
    def bn(h, g, be, rm, rv):
        return (h - rm) / jnp.sqrt(rv + BN_EPS) * g + be

    h = x @ p["w1"] + p["b1"]
    h = _leaky_relu(bn(h, p["g1"], p["be1"], p["rm1"], p["rv1"]), LEAKY_SLOPE)
    h = h @ p["w2"] + p["b2"]
    h = _leaky_relu(bn(h, p["g2"], p["be2"], p["rm2"], p["rv2"]), LEAKY_SLOPE)
    return h @ p["w3"] + p["b3"]


if __name__ == "__main__":
    # Small shapes consistent with the module: hid_dim = in_dim // 2, out_dim = 1.
    B, IN_DIM, OUT_DIM = 64, 64, 1
    HID = IN_DIM // 2

    key = jax.random.PRNGKey(0)
    kx, kx2, kp = jax.random.split(key, 3)
    x = jax.random.normal(kx, (B, IN_DIM), dtype=jnp.float32)
    raw = init_params(kp, IN_DIM, HID, OUT_DIM)
    ref = reference_forward(x, raw)

    # f32 compute path (strict check), single grid step.
    p32 = prepare_params(raw, compute_dtype=jnp.float32)
    out32 = jax.block_until_ready(discriminator_forward(x, p32, OUT_DIM))
    assert out32.shape == (B, OUT_DIM)
    assert out32.dtype == jnp.float32
    assert jnp.allclose(out32, ref, atol=1e-3, rtol=1e-3), "f32 mismatch vs reference"

    # Default bf16 weights/activations (f32 MXU accumulation), looser check.
    pbf16 = prepare_params(raw)  # compute_dtype defaults to bf16
    outbf = jax.block_until_ready(discriminator_forward(x, pbf16, OUT_DIM))
    assert outbf.shape == (B, OUT_DIM)
    assert jnp.allclose(outbf.astype(jnp.float32), ref, atol=7.5e-2, rtol=5e-2), \
        "bf16 mismatch vs reference"

    # Multi-step grid with a masked partial last tile (B=200, 64-row tiles).
    B2 = 200
    x2 = jax.random.normal(kx2, (B2, IN_DIM), dtype=jnp.float32)
    ref2 = reference_forward(x2, raw)
    out2 = jax.block_until_ready(discriminator_forward(x2, p32, OUT_DIM, block_b=64))
    assert out2.shape == (B2, OUT_DIM)
    assert jnp.allclose(out2, ref2, atol=1e-3, rtol=1e-3), "partial-tile mismatch"

    print("KERNEL_OK")
</pallas_src>

<mosaic_0001>
module attributes {stable_mosaic.version = 11 : i64} {
  func.func @disc_kernel(%arg0: i32, %arg1: memref<64x64xf32, #tpu.memory_space<vmem>>, %arg2: memref<64x128xf32, #tpu.memory_space<vmem>>, %arg3: memref<1x128xf32, #tpu.memory_space<vmem>>, %arg4: memref<128x128xf32, #tpu.memory_space<vmem>>, %arg5: memref<1x128xf32, #tpu.memory_space<vmem>>, %arg6: memref<128x128xf32, #tpu.memory_space<vmem>>, %arg7: memref<1x128xf32, #tpu.memory_space<vmem>>, %arg8: memref<64x128xf32, #tpu.memory_space<vmem>>) attributes {dimension_semantics = [#tpu.dimension_semantics<parallel>], iteration_bounds = array<i64: 1>, scalar_prefetch = 0 : i64, scratch_operands = 0 : i64, tpu.core_type = #tpu.core_type<tc>, window_params = [{transform_indices = @transform_0, window_bounds = array<i64: 64, 64>}, {pipeline_mode = #tpu.pipeline_mode<synchronous>, transform_indices = @transform_1, window_bounds = array<i64: 64, 128>}, {pipeline_mode = #tpu.pipeline_mode<synchronous>, transform_indices = @transform_2, window_bounds = array<i64: 1, 128>}, {pipeline_mode = #tpu.pipeline_mode<synchronous>, transform_indices = @transform_3, window_bounds = array<i64: 128, 128>}, {pipeline_mode = #tpu.pipeline_mode<synchronous>, transform_indices = @transform_4, window_bounds = array<i64: 1, 128>}, {pipeline_mode = #tpu.pipeline_mode<synchronous>, transform_indices = @transform_5, window_bounds = array<i64: 128, 128>}, {pipeline_mode = #tpu.pipeline_mode<synchronous>, transform_indices = @transform_6, window_bounds = array<i64: 1, 128>}, {transform_indices = @transform_7, window_bounds = array<i64: 64, 128>}]} {
    %c0 = arith.constant 0 : index
    %c0_0 = arith.constant 0 : index
    %0 = vector.load %arg1[%c0, %c0_0] : memref<64x64xf32, #tpu.memory_space<vmem>>, vector<64x64xf32>
    %c0_1 = arith.constant 0 : index
    %c0_2 = arith.constant 0 : index
    %1 = vector.load %arg2[%c0_1, %c0_2] : memref<64x128xf32, #tpu.memory_space<vmem>>, vector<64x128xf32>
    %cst = arith.constant dense<0.000000e+00> : vector<64x128xf32>
    %2 = tpu.matmul %0, %1, %cst {dimension_numbers = #tpu.dot_dimension_numbers<[1], [0], [0], [1], [0, 0, 1, 1], [], []>} : vector<64x64xf32>, vector<64x128xf32>, vector<64x128xf32> -> vector<64x128xf32>
    %c0_3 = arith.constant 0 : index
    %c0_4 = arith.constant 0 : index
    %3 = vector.load %arg3[%c0_3, %c0_4] : memref<1x128xf32, #tpu.memory_space<vmem>>, vector<1x128xf32>
    %4 = vector.broadcast %3 : vector<1x128xf32> to vector<64x128xf32>
    %5 = arith.addf %2, %4 : vector<64x128xf32>
    %cst_5 = arith.constant 0.000000e+00 : f32
    %6 = vector.broadcast %cst_5 : f32 to vector<64x128xf32>
    %7 = arith.cmpf oge, %5, %6 : vector<64x128xf32>
    %cst_6 = arith.constant 2.000000e-01 : f32
    %8 = vector.broadcast %cst_6 : f32 to vector<64x128xf32>
    %9 = arith.mulf %8, %5 : vector<64x128xf32>
    %10 = arith.select %7, %5, %9 : vector<64x128xi1>, vector<64x128xf32>
    %c0_7 = arith.constant 0 : index
    %c0_8 = arith.constant 0 : index
    %11 = vector.load %arg4[%c0_7, %c0_8] : memref<128x128xf32, #tpu.memory_space<vmem>>, vector<128x128xf32>
    %cst_9 = arith.constant dense<0.000000e+00> : vector<64x128xf32>
    %12 = tpu.matmul %10, %11, %cst_9 {dimension_numbers = #tpu.dot_dimension_numbers<[1], [0], [0], [1], [0, 0, 1, 1], [], []>} : vector<64x128xf32>, vector<128x128xf32>, vector<64x128xf32> -> vector<64x128xf32>
    %c0_10 = arith.constant 0 : index
    %c0_11 = arith.constant 0 : index
    %13 = vector.load %arg5[%c0_10, %c0_11] : memref<1x128xf32, #tpu.memory_space<vmem>>, vector<1x128xf32>
    %14 = vector.broadcast %13 : vector<1x128xf32> to vector<64x128xf32>
    %15 = arith.addf %12, %14 : vector<64x128xf32>
    %cst_12 = arith.constant 0.000000e+00 : f32
    %16 = vector.broadcast %cst_12 : f32 to vector<64x128xf32>
    %17 = arith.cmpf oge, %15, %16 : vector<64x128xf32>
    %cst_13 = arith.constant 2.000000e-01 : f32
    %18 = vector.broadcast %cst_13 : f32 to vector<64x128xf32>
    %19 = arith.mulf %18, %15 : vector<64x128xf32>
    %20 = arith.select %17, %15, %19 : vector<64x128xi1>, vector<64x128xf32>
    %c0_14 = arith.constant 0 : index
    %c0_15 = arith.constant 0 : index
    %21 = vector.load %arg6[%c0_14, %c0_15] : memref<128x128xf32, #tpu.memory_space<vmem>>, vector<128x128xf32>
    %cst_16 = arith.constant dense<0.000000e+00> : vector<64x128xf32>
    %22 = tpu.matmul %20, %21, %cst_16 {dimension_numbers = #tpu.dot_dimension_numbers<[1], [0], [0], [1], [0, 0, 1, 1], [], []>} : vector<64x128xf32>, vector<128x128xf32>, vector<64x128xf32> -> vector<64x128xf32>
    %c0_17 = arith.constant 0 : index
    %c0_18 = arith.constant 0 : index
    %23 = vector.load %arg7[%c0_17, %c0_18] : memref<1x128xf32, #tpu.memory_space<vmem>>, vector<1x128xf32>
    %24 = vector.broadcast %23 : vector<1x128xf32> to vector<64x128xf32>
    %25 = arith.addf %22, %24 : vector<64x128xf32>
    %c0_19 = arith.constant 0 : index
    %c0_20 = arith.constant 0 : index
    %26 = vector.load %arg8[%c0_19, %c0_20] : memref<64x128xf32, #tpu.memory_space<vmem>>, vector<64x128xf32>
    tpu.vector_store %arg8[%c0_19, %c0_20], %25 {strides = array<i32>} : memref<64x128xf32, #tpu.memory_space<vmem>>, vector<64x128xf32>,
    return
  }
  func.func @transform_0(%arg0: i32) -> (i32, i32) {
    %c0_i32 = arith.constant 0 : i32
    %c0_i32_0 = arith.constant 0 : i32
    return %arg0, %c0_i32 : i32, i32
  }
  func.func @transform_1(%arg0: i32) -> (i32, i32) {
    %c0_i32 = arith.constant 0 : i32
    %c0_i32_0 = arith.constant 0 : i32
    %c0_i32_1 = arith.constant 0 : i32
    return %c0_i32, %c0_i32_0 : i32, i32
  }
  func.func @transform_2(%arg0: i32) -> (i32, i32) {
    %c0_i32 = arith.constant 0 : i32
    %c0_i32_0 = arith.constant 0 : i32
    %c0_i32_1 = arith.constant 0 : i32
    return %c0_i32, %c0_i32_0 : i32, i32
  }
  func.func @transform_3(%arg0: i32) -> (i32, i32) {
    %c0_i32 = arith.constant 0 : i32
    %c0_i32_0 = arith.constant 0 : i32
    %c0_i32_1 = arith.constant 0 : i32
    return %c0_i32, %c0_i32_0 : i32, i32
  }
  func.func @transform_4(%arg0: i32) -> (i32, i32) {
    %c0_i32 = arith.constant 0 : i32
    %c0_i32_0 = arith.constant 0 : i32
    %c0_i32_1 = arith.constant 0 : i32
    return %c0_i32, %c0_i32_0 : i32, i32
  }
  func.func @transform_5(%arg0: i32) -> (i32, i32) {
    %c0_i32 = arith.constant 0 : i32
    %c0_i32_0 = arith.constant 0 : i32
    %c0_i32_1 = arith.constant 0 : i32
    return %c0_i32, %c0_i32_0 : i32, i32
  }
  func.func @transform_6(%arg0: i32) -> (i32, i32) {
    %c0_i32 = arith.constant 0 : i32
    %c0_i32_0 = arith.constant 0 : i32
    %c0_i32_1 = arith.constant 0 : i32
    return %c0_i32, %c0_i32_0 : i32, i32
  }
  func.func @transform_7(%arg0: i32) -> (i32, i32) {
    %c0_i32 = arith.constant 0 : i32
    %c0_i32_0 = arith.constant 0 : i32
    return %arg0, %c0_i32 : i32, i32
  }
}

module attributes {stable_mosaic.version = 11 : i64} {
  func.func @disc_kernel(%arg0: i32, %arg1: memref<64x64xf32, #tpu.memory_space<vmem>>, %arg2: memref<64x128xf32, #tpu.memory_space<vmem>>, %arg3: memref<1x128xf32, #tpu.memory_space<vmem>>, %arg4: memref<128x128xf32, #tpu.memory_space<vmem>>, %arg5: memref<1x128xf32, #tpu.memory_space<vmem>>, %arg6: memref<128x128xf32, #tpu.memory_space<vmem>>, %arg7: memref<1x128xf32, #tpu.memory_space<vmem>>, %arg8: memref<64x128xf32, #tpu.memory_space<vmem>>) attributes {dimension_semantics = [#tpu.dimension_semantics<parallel>], iteration_bounds = array<i64: 1>, scalar_prefetch = 0 : i64, scratch_operands = 0 : i64, tpu.core_type = #tpu.core_type<tc>, window_params = [{transform_indices = @transform_0, window_bounds = array<i64: 64, 64>}, {pipeline_mode = #tpu.pipeline_mode<synchronous>, transform_indices = @transform_1, window_bounds = array<i64: 64, 128>}, {pipeline_mode = #tpu.pipeline_mode<synchronous>, transform_indices = @transform_2, window_bounds = array<i64: 1, 128>}, {pipeline_mode = #tpu.pipeline_mode<synchronous>, transform_indices = @transform_3, window_bounds = array<i64: 128, 128>}, {pipeline_mode = #tpu.pipeline_mode<synchronous>, transform_indices = @transform_4, window_bounds = array<i64: 1, 128>}, {pipeline_mode = #tpu.pipeline_mode<synchronous>, transform_indices = @transform_5, window_bounds = array<i64: 128, 128>}, {pipeline_mode = #tpu.pipeline_mode<synchronous>, transform_indices = @transform_6, window_bounds = array<i64: 1, 128>}, {transform_indices = @transform_7, window_bounds = array<i64: 64, 128>}]} {
    %c0 = arith.constant 0 : index
    %c0_0 = arith.constant 0 : index
    %0 = vector.load %arg1[%c0, %c0_0] : memref<64x64xf32, #tpu.memory_space<vmem>>, vector<64x64xf32>
    %c0_1 = arith.constant 0 : index
    %c0_2 = arith.constant 0 : index
    %1 = vector.load %arg2[%c0_1, %c0_2] : memref<64x128xf32, #tpu.memory_space<vmem>>, vector<64x128xf32>
    %cst = arith.constant dense<0.000000e+00> : vector<64x128xf32>
    %2 = tpu.matmul %0, %1, %cst {dimension_numbers = #tpu.dot_dimension_numbers<[1], [0], [0], [1], [0, 0, 1, 1], [], []>} : vector<64x64xf32>, vector<64x128xf32>, vector<64x128xf32> -> vector<64x128xf32>
    %c0_3 = arith.constant 0 : index
    %c0_4 = arith.constant 0 : index
    %3 = vector.load %arg3[%c0_3, %c0_4] : memref<1x128xf32, #tpu.memory_space<vmem>>, vector<1x128xf32>
    %4 = vector.broadcast %3 : vector<1x128xf32> to vector<64x128xf32>
    %5 = arith.addf %2, %4 : vector<64x128xf32>
    %cst_5 = arith.constant 0.000000e+00 : f32
    %6 = vector.broadcast %cst_5 : f32 to vector<64x128xf32>
    %7 = arith.cmpf oge, %5, %6 : vector<64x128xf32>
    %cst_6 = arith.constant 2.000000e-01 : f32
    %8 = vector.broadcast %cst_6 : f32 to vector<64x128xf32>
    %9 = arith.mulf %8, %5 : vector<64x128xf32>
    %10 = arith.select %7, %5, %9 : vector<64x128xi1>, vector<64x128xf32>
    %c0_7 = arith.constant 0 : index
    %c0_8 = arith.constant 0 : index
    %11 = vector.load %arg4[%c0_7, %c0_8] : memref<128x128xf32, #tpu.memory_space<vmem>>, vector<128x128xf32>
    %cst_9 = arith.constant dense<0.000000e+00> : vector<64x128xf32>
    %12 = tpu.matmul %10, %11, %cst_9 {dimension_numbers = #tpu.dot_dimension_numbers<[1], [0], [0], [1], [0, 0, 1, 1], [], []>} : vector<64x128xf32>, vector<128x128xf32>, vector<64x128xf32> -> vector<64x128xf32>
    %c0_10 = arith.constant 0 : index
    %c0_11 = arith.constant 0 : index
    %13 = vector.load %arg5[%c0_10, %c0_11] : memref<1x128xf32, #tpu.memory_space<vmem>>, vector<1x128xf32>
    %14 = vector.broadcast %13 : vector<1x128xf32> to vector<64x128xf32>
    %15 = arith.addf %12, %14 : vector<64x128xf32>
    %cst_12 = arith.constant 0.000000e+00 : f32
    %16 = vector.broadcast %cst_12 : f32 to vector<64x128xf32>
    %17 = arith.cmpf oge, %15, %16 : vector<64x128xf32>
    %cst_13 = arith.constant 2.000000e-01 : f32
    %18 = vector.broadcast %cst_13 : f32 to vector<64x128xf32>
    %19 = arith.mulf %18, %15 : vector<64x128xf32>
    %20 = arith.select %17, %15, %19 : vector<64x128xi1>, vector<64x128xf32>
    %c0_14 = arith.constant 0 : index
    %c0_15 = arith.constant 0 : index
    %21 = vector.load %arg6[%c0_14, %c0_15] : memref<128x128xf32, #tpu.memory_space<vmem>>, vector<128x128xf32>
    %cst_16 = arith.constant dense<0.000000e+00> : vector<64x128xf32>
    %22 = tpu.matmul %20, %21, %cst_16 {dimension_numbers = #tpu.dot_dimension_numbers<[1], [0], [0], [1], [0, 0, 1, 1], [], []>} : vector<64x128xf32>, vector<128x128xf32>, vector<64x128xf32> -> vector<64x128xf32>
    %c0_17 = arith.constant 0 : index
    %c0_18 = arith.constant 0 : index
    %23 = vector.load %arg7[%c0_17, %c0_18] : memref<1x128xf32, #tpu.memory_space<vmem>>, vector<1x128xf32>
    %24 = vector.broadcast %23 : vector<1x128xf32> to vector<64x128xf32>
    %25 = arith.addf %22, %24 : vector<64x128xf32>
    %c0_19 = arith.constant 0 : index
    %c0_20 = arith.constant 0 : index
    %26 = vector.load %arg8[%c0_19, %c0_20] : memref<64x128xf32, #tpu.memory_space<vmem>>, vector<64x128xf32>
    tpu.vector_store %arg8[%c0_19, %c0_20], %25 {strides = array<i32>} : memref<64x128xf32, #tpu.memory_space<vmem>>, vector<64x128xf32>,
    return
  }
  func.func @transform_0(%arg0: i32) -> (i32, i32) {
    %c0_i32 = arith.constant 0 : i32
    %c0_i32_0 = arith.constant 0 : i32
    return %arg0, %c0_i32 : i32, i32
  }
  func.func @transform_1(%arg0: i32) -> (i32, i32) {
    %c0_i32 = arith.constant 0 : i32
    %c0_i32_0 = arith.constant 0 : i32
    %c0_i32_1 = arith.constant 0 : i32
    return %c0_i32, %c0_i32_0 : i32, i32
  }
  func.func @transform_2(%arg0: i32) -> (i32, i32) {
    %c0_i32 = arith.constant 0 : i32
    %c0_i32_0 = arith.constant 0 : i32
    %c0_i32_1 = arith.constant 0 : i32
    return %c0_i32, %c0_i32_0 : i32, i32
  }
  func.func @transform_3(%arg0: i32) -> (i32, i32) {
    %c0_i32 = arith.constant 0 : i32
    %c0_i32_0 = arith.constant 0 : i32
    %c0_i32_1 = arith.constant 0 : i32
    return %c0_i32, %c0_i32_0 : i32, i32
  }
  func.func @transform_4(%arg0: i32) -> (i32, i32) {
    %c0_i32 = arith.constant 0 : i32
    %c0_i32_0 = arith.constant 0 : i32
    %c0_i32_1 = arith.constant 0 : i32
    return %c0_i32, %c0_i32_0 : i32, i32
  }
  func.func @transform_5(%arg0: i32) -> (i32, i32) {
    %c0_i32 = arith.constant 0 : i32
    %c0_i32_0 = arith.constant 0 : i32
    %c0_i32_1 = arith.constant 0 : i32
    return %c0_i32, %c0_i32_0 : i32, i32
  }
  func.func @transform_6(%arg0: i32) -> (i32, i32) {
    %c0_i32 = arith.constant 0 : i32
    %c0_i32_0 = arith.constant 0 : i32
    %c0_i32_1 = arith.constant 0 : i32
    return %c0_i32, %c0_i32_0 : i32, i32
  }
  func.func @transform_7(%arg0: i32) -> (i32, i32) {
    %c0_i32 = arith.constant 0 : i32
    %c0_i32_0 = arith.constant 0 : i32
    return %arg0, %c0_i32 : i32, i32
  }
}

</mosaic_0001>

<llo_original>
// kernel: _discriminator_forward.1
$region0: #{_discriminator_forward.1}
  #allocation0 [shape = 'u32[]', space=smem, size = 0x4, offset = 0x4, fixed_abs, tag = 'smem constant byte address 0x4 - core index']
  #allocation1 [shape = 'u32[72,128]{1,0:T(1,128)}', space=vmem, size = 0x9000, scoped, tag = 'internal scratch']
  %s0 = inlined_call_operand.hbm [shape: f32[64,64], index: 0, kind: input, shape index: {}]
  %s1 = inlined_call_operand.hbm [shape: f32[64,128], index: 1, kind: input, shape index: {}]
  %s2 = inlined_call_operand.hbm [shape: f32[1,128], index: 2, kind: input, shape index: {}]
  %s3 = inlined_call_operand.hbm [shape: f32[128,128], index: 3, kind: input, shape index: {}]
  %s4 = inlined_call_operand.vmem [shape: f32[1,128], index: 4, kind: input, shape index: {}]
  %s5 = inlined_call_operand.hbm [shape: f32[128,128], index: 5, kind: input, shape index: {}]
  %s6 = inlined_call_operand.vmem [shape: f32[1,128], index: 6, kind: input, shape index: {}]
  %s7 = inlined_call_operand.vmem [shape: f32[64,128], index: 7, kind: output, shape index: {}]
  %s8 = sld [smem:[#allocation0]]
  $region58: #{_discriminator_forward.1} parent=0
    _
  %s10 = ssub.s32 1, %s8
  %s11 = scalar_select 0, %s10, %s8
  $region1: #{_discriminator_forward.1} parent=0
    #allocation2 [shape = 'u8[32768]{0}', space=vmem, size = 0x8000, scoped, tag = 'input window, operand 0, single buffered']
    #allocation3 [shape = 's32[1]{0}', space=sflag, size = 0x4, scoped, tag = 'scoped memory for _discriminator_forward.1']
    #allocation4 [shape = 'u8[32768]{0}', space=vmem, size = 0x8000, scoped, tag = 'input window, operand 1, single buffered']
    #allocation5 [shape = 's32[1]{0}', space=sflag, size = 0x4, scoped, tag = 'scoped memory for _discriminator_forward.1']
    #allocation6 [shape = 'u8[512]{0}', space=vmem, size = 0x400, scoped, tag = 'input window, operand 2, single buffered']
    #allocation7 [shape = 'u8[65536]{0}', space=vmem, size = 0x10000, scoped, tag = 'input window, operand 3, single buffered']
    #allocation8 [shape = 's32[1]{0}', space=sflag, size = 0x4, scoped, tag = 'scoped memory for _discriminator_forward.1']
    #allocation9 [shape = 'u8[65536]{0}', space=vmem, size = 0x10000, scoped, tag = 'input window, operand 5, single buffered']
    %12 = vsyncpa [#allocation3], 0
    %13 = vsyncpa [#allocation5], 0
    %14 = vsyncpa [#allocation8], 0
    // Predicated region
    $region2: #{_discriminator_forward.1} parent=1 // pred_check
      _
    $region3: #{_discriminator_forward.1} parent=1 // pred_check_branch
      %16 = sbr.rel (0) target = $region5
    $region4: #{_discriminator_forward.1} parent=1 // pred_region
      %18 = vsyncadd [#allocation3], 0
      %s19 = sshll.u32 %s0, 4
      %s20 = int_to_ptr.hbm [resolvable:$true] %s19
      %s21 = sshll.u32 [#allocation2], 4
      %s22 = int_to_ptr.vmem [resolvable:$true] %s21
      %27 = dma.hbm_to_vmem [thread:$0]  %s20, 1024, %s22, [#allocation3], 128, 128, 8
    $region5: #{_discriminator_forward.1} parent=1 // pred_fallthru
      _
    // Predicated region
    $region6: #{_discriminator_forward.1} parent=1 // pred_check
      _
    $region7: #{_discriminator_forward.1} parent=1 // pred_check_branch
      %29 = sbr.rel (0) target = $region9
    $region8: #{_discriminator_forward.1} parent=1 // pred_region
      %31 = vsyncadd [#allocation5], 0
      %s32 = sshll.u32 %s1, 4
      %s33 = int_to_ptr.hbm [resolvable:$true] %s32
      %s34 = sshll.u32 [#allocation4], 4
      %s35 = int_to_ptr.vmem [resolvable:$true] %s34
      %40 = dma.hbm_to_vmem [thread:$0]  %s33, 1024, %s35, [#allocation5], 128, 128, 8
    $region9: #{_discriminator_forward.1} parent=1 // pred_fallthru
      _
    // Predicated region
    $region10: #{_discriminator_forward.1} parent=1 // pred_check
      _
    $region11: #{_discriminator_forward.1} parent=1 // pred_check_branch
      %42 = sbr.rel (0) target = $region13
    $region12: #{_discriminator_forward.1} parent=1 // pred_region
      %44 = vsyncadd [#allocation5], 0
      %s46 = sshll.u32 %s2, 4
      %s47 = int_to_ptr.hbm [resolvable:$true] %s46
      %s48 = sshll.u32 [#allocation6], 4
      %s49 = int_to_ptr.vmem [resolvable:$true] %s48
      %51 = dma.hbm_to_vmem [thread:$0]  %s47, 16, %s49, [#allocation5]
    $region13: #{_discriminator_forward.1} parent=1 // pred_fallthru
      _
    // Predicated region
    $region14: #{_discriminator_forward.1} parent=1 // pred_check
      _
    $region15: #{_discriminator_forward.1} parent=1 // pred_check_branch
      %53 = sbr.rel (0) target = $region17
    $region16: #{_discriminator_forward.1} parent=1 // pred_region
      %55 = vsyncadd [#allocation8], 0
      %s56 = sshll.u32 %s3, 4
      %s57 = int_to_ptr.hbm [resolvable:$true] %s56
      %s58 = sshll.u32 [#allocation7], 4
      %s59 = int_to_ptr.vmem [resolvable:$true] %s58
      %64 = dma.hbm_to_vmem [thread:$0]  %s57, 2048, %s59, [#allocation8], 128, 128, 8
    $region17: #{_discriminator_forward.1} parent=1 // pred_fallthru
      _
    // Predicated region
    $region18: #{_discriminator_forward.1} parent=1 // pred_check
      _
    $region19: #{_discriminator_forward.1} parent=1 // pred_check_branch
      %66 = sbr.rel (0) target = $region21
    $region20: #{_discriminator_forward.1} parent=1 // pred_region
      _
    $region21: #{_discriminator_forward.1} parent=1 // pred_fallthru
      _
    // Predicated region
    $region22: #{_discriminator_forward.1} parent=1 // pred_check
      _
    $region23: #{_discriminator_forward.1} parent=1 // pred_check_branch
      %68 = sbr.rel (0) target = $region25
    $region24: #{_discriminator_forward.1} parent=1 // pred_region
      %70 = vsyncadd [#allocation8], 0
      %s71 = sshll.u32 %s5, 4
      %s72 = int_to_ptr.hbm [resolvable:$true] %s71
      %s73 = sshll.u32 [#allocation9], 4
      %s74 = int_to_ptr.vmem [resolvable:$true] %s73
      %79 = dma.hbm_to_vmem [thread:$0]  %s72, 2048, %s74, [#allocation8], 128, 128, 8
    $region25: #{_discriminator_forward.1} parent=1 // pred_fallthru
      _
    // Predicated region
    $region26: #{_discriminator_forward.1} parent=1 // pred_check
      _
    $region27: #{_discriminator_forward.1} parent=1 // pred_check_branch
      %81 = sbr.rel (0) target = $region29
    $region28: #{_discriminator_forward.1} parent=1 // pred_region
      _
    $region29: #{_discriminator_forward.1} parent=1 // pred_fallthru
      _
    // Predicated region
    $region30: #{_discriminator_forward.1} parent=1 // pred_check
      _
    $region31: #{_discriminator_forward.1} parent=1 // pred_check_branch
      %83 = sbr.rel (0) target = $region33
    $region32: #{_discriminator_forward.1} parent=1 // pred_region
      %85 = dma.done [#allocation3], 1024
    $region33: #{_discriminator_forward.1} parent=1 // pred_fallthru
      _
    // Predicated region
    $region34: #{_discriminator_forward.1} parent=1 // pred_check
      _
    $region35: #{_discriminator_forward.1} parent=1 // pred_check_branch
      %87 = sbr.rel (0) target = $region37
    $region36: #{_discriminator_forward.1} parent=1 // pred_region
      %89 = dma.done [#allocation5], 1024
    $region37: #{_discriminator_forward.1} parent=1 // pred_fallthru
      _
    // Predicated region
    $region38: #{_discriminator_forward.1} parent=1 // pred_check
      _
    $region39: #{_discriminator_forward.1} parent=1 // pred_check_branch
      %91 = sbr.rel (0) target = $region41
    $region40: #{_discriminator_forward.1} parent=1 // pred_region
      %93 = dma.done [#allocation5], 16
    $region41: #{_discriminator_forward.1} parent=1 // pred_fallthru
      _
    // Predicated region
    $region42: #{_discriminator_forward.1} parent=1 // pred_check
      _
    $region43: #{_discriminator_forward.1} parent=1 // pred_check_branch
      %95 = sbr.rel (0) target = $region45
    $region44: #{_discriminator_forward.1} parent=1 // pred_region
      %97 = dma.done [#allocation8], 2048
    $region45: #{_discriminator_forward.1} parent=1 // pred_fallthru
      _
    // Predicated region
    $region46: #{_discriminator_forward.1} parent=1 // pred_check
      _
    $region47: #{_discriminator_forward.1} parent=1 // pred_check_branch
      %99 = sbr.rel (0) target = $region49
    $region48: #{_discriminator_forward.1} parent=1 // pred_region
      %101 = dma.done [#allocation8], 2048
    $region49: #{_discriminator_forward.1} parent=1 // pred_fallthru
      _
    %v102 = vld [vmem:[#allocation2] sm:$0xff]
    %v103 = vld [vmem:[#allocation2 + $0x8] sm:$0xff]
    %v104 = vld [vmem:[#allocation2 + $0x10] sm:$0xff]
    %v105 = vld [vmem:[#allocation2 + $0x18] sm:$0xff]
    %v106 = vld [vmem:[#allocation2 + $0x20] sm:$0xff]
    %v107 = vld [vmem:[#allocation2 + $0x28] sm:$0xff]
    %v108 = vld [vmem:[#allocation2 + $0x30] sm:$0xff]
    %v109 = vld [vmem:[#allocation2 + $0x38] sm:$0xff]
    %v110 = vld [vmem:[#allocation4] sm:$0xff]
    %v111 = vld [vmem:[#allocation4 + $0x8] sm:$0xff]
    %v112 = vld [vmem:[#allocation4 + $0x10] sm:$0xff]
    %v113 = vld [vmem:[#allocation4 + $0x18] sm:$0xff]
    %v114 = vld [vmem:[#allocation4 + $0x20] sm:$0xff]
    %v115 = vld [vmem:[#allocation4 + $0x28] sm:$0xff]
    %v116 = vld [vmem:[#allocation4 + $0x30] sm:$0xff]
    %v117 = vld [vmem:[#allocation4 + $0x38] sm:$0xff]
    %v118 = vld [vmem:[#allocation6] sm:$0x1]
    %v120 = vperm.slane %v118, 0
    %vm122 = vcmask 523264
    %v124 = vsel %vm122, %v102, 0
    %v127 = vsel %vm122, %v103, 0
    %v130 = vsel %vm122, %v104, 0
    %v133 = vsel %vm122, %v105, 0
    %v136 = vsel %vm122, %v106, 0
    %v139 = vsel %vm122, %v107, 0
    %v142 = vsel %vm122, %v108, 0
    %v145 = vsel %vm122, %v109, 0
    %147 = vmatpush.msra.mxu0 0.0
    %148 = vmatpush.msra.mxu0 0.0
    %149 = vmatpush.msra.mxu0 0.0
    %150 = vmatpush.msra.mxu0 0.0
    %151 = vmatpush.msra.mxu0 0.0
    %152 = vmatpush.msra.mxu0 0.0
    %153 = vmatpush.msra.mxu0 0.0
    %154 = vmatpush.msra.mxu0 0.0
    %155 = vmatpush.msra.mxu0 %v117
    %156 = vmatpush.msra.mxu0 %v116
    %157 = vmatpush.msra.mxu0 %v115
    %158 = vmatpush.msra.mxu0 %v114
    %159 = vmatpush.msra.mxu0 %v113
    %160 = vmatpush.msra.mxu0 %v112
    %161 = vmatpush.msra.mxu0 %v111
    %162 = vmatpush.msra.mxu0 %v110
    %163 = vmatmul.f32.gmra.mxu0 %v124
    %v164 = vpop.f32.mrf.mxu0
    %v165 = vadd.f32 %v120, %v164
    %166 = vmatmul.f32.gmra.mxu0 %v127
    %v167 = vpop.f32.mrf.mxu0
    %v168 = vadd.f32 %v120, %v167
    %169 = vmatmul.f32.gmra.mxu0 %v130
    %v170 = vpop.f32.mrf.mxu0
    %v171 = vadd.f32 %v120, %v170
    %172 = vmatmul.f32.gmra.mxu0 %v133
    %v173 = vpop.f32.mrf.mxu0
    %v174 = vadd.f32 %v120, %v173
    %175 = vmatmul.f32.gmra.mxu0 %v136
    %v176 = vpop.f32.mrf.mxu0
    %v177 = vadd.f32 %v120, %v176
    %178 = vmatmul.f32.gmra.mxu0 %v139
    %v179 = vpop.f32.mrf.mxu0
    %v180 = vadd.f32 %v120, %v179
    %181 = vmatmul.f32.gmra.mxu0 %v142
    %v182 = vpop.f32.mrf.mxu0
    %v183 = vadd.f32 %v120, %v182
    %184 = vmatmul.f32.gmra.mxu0 %v145
    %v185 = vpop.f32.mrf.mxu0
    %v186 = vadd.f32 %v120, %v185
    %187 = vdwg.mxu0
    %vm188 = vcmp.ge.f32.partialorder %v165, 0.0
    %vm189 = vcmp.ge.f32.partialorder %v168, 0.0
    %vm190 = vcmp.ge.f32.partialorder %v171, 0.0
    %vm191 = vcmp.ge.f32.partialorder %v174, 0.0
    %vm192 = vcmp.ge.f32.partialorder %v177, 0.0
    %vm193 = vcmp.ge.f32.partialorder %v180, 0.0
    %vm194 = vcmp.ge.f32.partialorder %v183, 0.0
    %vm195 = vcmp.ge.f32.partialorder %v186, 0.0
    %v196 = vmul.f32 %v165, 0.2
    %v197 = vmul.f32 %v168, 0.2
    %v198 = vmul.f32 %v171, 0.2
    %v199 = vmul.f32 %v174, 0.2
    %v200 = vmul.f32 %v177, 0.2
    %v201 = vmul.f32 %v180, 0.2
    %v202 = vmul.f32 %v183, 0.2
    %v203 = vmul.f32 %v186, 0.2
    %v204 = vsel %vm188, %v165, %v196
    %v205 = vsel %vm189, %v168, %v197
    %v206 = vsel %vm190, %v171, %v198
    %v207 = vsel %vm191, %v174, %v199
    %v208 = vsel %vm192, %v177, %v200
    %v209 = vsel %vm193, %v180, %v201
    %v210 = vsel %vm194, %v183, %v202
    %v211 = vsel %vm195, %v186, %v203
    %v212 = vld [vmem:[#allocation7] sm:$0xff]
    %v213 = vld [vmem:[#allocation7 + $0x8] sm:$0xff]
    %v214 = vld [vmem:[#allocation7 + $0x10] sm:$0xff]
    %v215 = vld [vmem:[#allocation7 + $0x18] sm:$0xff]
    %v216 = vld [vmem:[#allocation7 + $0x20] sm:$0xff]
    %v217 = vld [vmem:[#allocation7 + $0x28] sm:$0xff]
    %v218 = vld [vmem:[#allocation7 + $0x30] sm:$0xff]
    %v219 = vld [vmem:[#allocation7 + $0x38] sm:$0xff]
    %v220 = vld [vmem:[#allocation7 + $0x40] sm:$0xff]
    %v221 = vld [vmem:[#allocation7 + $0x48] sm:$0xff]
    %v222 = vld [vmem:[#allocation7 + $0x50] sm:$0xff]
    %v223 = vld [vmem:[#allocation7 + $0x58] sm:$0xff]
    %v224 = vld [vmem:[#allocation7 + $0x60] sm:$0xff]
    %v225 = vld [vmem:[#allocation7 + $0x68] sm:$0xff]
    %v226 = vld [vmem:[#allocation7 + $0x70] sm:$0xff]
    %v227 = vld [vmem:[#allocation7 + $0x78] sm:$0xff]
    %v228 = vld [vmem:[%s4] sm:$0x1]
    %v230 = vperm.slane %v228, 0
    %232 = vmatpush.msra.mxu0 %v227
    %233 = vmatpush.msra.mxu0 %v226
    %234 = vmatpush.msra.mxu0 %v225
    %235 = vmatpush.msra.mxu0 %v224
    %236 = vmatpush.msra.mxu0 %v223
    %237 = vmatpush.msra.mxu0 %v222
    %238 = vmatpush.msra.mxu0 %v221
    %239 = vmatpush.msra.mxu0 %v220
    %240 = vmatpush.msra.mxu0 %v219
    %241 = vmatpush.msra.mxu0 %v218
    %242 = vmatpush.msra.mxu0 %v217
    %243 = vmatpush.msra.mxu0 %v216
    %244 = vmatpush.msra.mxu0 %v215
    %245 = vmatpush.msra.mxu0 %v214
    %246 = vmatpush.msra.mxu0 %v213
    %247 = vmatpush.msra.mxu0 %v212
    %248 = vmatmul.f32.gmra.mxu0 %v204
    %v249 = vpop.f32.mrf.mxu0
    %v250 = vadd.f32 %v230, %v249
    %251 = vmatmul.f32.gmra.mxu0 %v205
    %v252 = vpop.f32.mrf.mxu0
    %v253 = vadd.f32 %v230, %v252
    %254 = vmatmul.f32.gmra.mxu0 %v206
    %v255 = vpop.f32.mrf.mxu0
    %v256 = vadd.f32 %v230, %v255
    %257 = vmatmul.f32.gmra.mxu0 %v207
    %v258 = vpop.f32.mrf.mxu0
    %v259 = vadd.f32 %v230, %v258
    %260 = vmatmul.f32.gmra.mxu0 %v208
    %v261 = vpop.f32.mrf.mxu0
    %v262 = vadd.f32 %v230, %v261
    %263 = vmatmul.f32.gmra.mxu0 %v209
    %v264 = vpop.f32.mrf.mxu0
    %v265 = vadd.f32 %v230, %v264
    %266 = vmatmul.f32.gmra.mxu0 %v210
    %v267 = vpop.f32.mrf.mxu0
    %v268 = vadd.f32 %v230, %v267
    %269 = vmatmul.f32.gmra.mxu0 %v211
    %v270 = vpop.f32.mrf.mxu0
    %v271 = vadd.f32 %v230, %v270
    %272 = vdwg.mxu0
    %vm273 = vcmp.ge.f32.partialorder %v250, 0.0
    %vm274 = vcmp.ge.f32.partialorder %v253, 0.0
    %vm275 = vcmp.ge.f32.partialorder %v256, 0.0
    %vm276 = vcmp.ge.f32.partialorder %v259, 0.0
    %vm277 = vcmp.ge.f32.partialorder %v262, 0.0
    %vm278 = vcmp.ge.f32.partialorder %v265, 0.0
    %vm279 = vcmp.ge.f32.partialorder %v268, 0.0
    %vm280 = vcmp.ge.f32.partialorder %v271, 0.0
    %v281 = vmul.f32 %v250, 0.2
    %v282 = vmul.f32 %v253, 0.2
    %v283 = vmul.f32 %v256, 0.2
    %v284 = vmul.f32 %v259, 0.2
    %v285 = vmul.f32 %v262, 0.2
    %v286 = vmul.f32 %v265, 0.2
    %v287 = vmul.f32 %v268, 0.2
    %v288 = vmul.f32 %v271, 0.2
    %v289 = vsel %vm273, %v250, %v281
    %v290 = vsel %vm274, %v253, %v282
    %v291 = vsel %vm275, %v256, %v283
    %v292 = vsel %vm276, %v259, %v284
    %v293 = vsel %vm277, %v262, %v285
    %v294 = vsel %vm278, %v265, %v286
    %v295 = vsel %vm279, %v268, %v287
    %v296 = vsel %vm280, %v271, %v288
    %v297 = vld [vmem:[#allocation9] sm:$0xff]
    %v298 = vld [vmem:[#allocation9 + $0x8] sm:$0xff]
    %v299 = vld [vmem:[#allocation9 + $0x10] sm:$0xff]
    %v300 = vld [vmem:[#allocation9 + $0x18] sm:$0xff]
    %v301 = vld [vmem:[#allocation9 + $0x20] sm:$0xff]
    %v302 = vld [vmem:[#allocation9 + $0x28] sm:$0xff]
    %v303 = vld [vmem:[#allocation9 + $0x30] sm:$0xff]
    %v304 = vld [vmem:[#allocation9 + $0x38] sm:$0xff]
    %v305 = vld [vmem:[#allocation9 + $0x40] sm:$0xff]
    %v306 = vld [vmem:[#allocation9 + $0x48] sm:$0xff]
    %v307 = vld [vmem:[#allocation9 + $0x50] sm:$0xff]
    %v308 = vld [vmem:[#allocation9 + $0x58] sm:$0xff]
    %v309 = vld [vmem:[#allocation9 + $0x60] sm:$0xff]
    %v310 = vld [vmem:[#allocation9 + $0x68] sm:$0xff]
    %v311 = vld [vmem:[#allocation9 + $0x70] sm:$0xff]
    %v312 = vld [vmem:[#allocation9 + $0x78] sm:$0xff]
    %v313 = vld [vmem:[%s6] sm:$0x1]
    %v315 = vperm.slane %v313, 0
    %317 = vmatpush.msra.mxu0 %v312
    %318 = vmatpush.msra.mxu0 %v311
    %319 = vmatpush.msra.mxu0 %v310
    %320 = vmatpush.msra.mxu0 %v309
    %321 = vmatpush.msra.mxu0 %v308
    %322 = vmatpush.msra.mxu0 %v307
    %323 = vmatpush.msra.mxu0 %v306
    %324 = vmatpush.msra.mxu0 %v305
    %325 = vmatpush.msra.mxu0 %v304
    %326 = vmatpush.msra.mxu0 %v303
    %327 = vmatpush.msra.mxu0 %v302
    %328 = vmatpush.msra.mxu0 %v301
    %329 = vmatpush.msra.mxu0 %v300
    %330 = vmatpush.msra.mxu0 %v299
    %331 = vmatpush.msra.mxu0 %v298
    %332 = vmatpush.msra.mxu0 %v297
    %333 = vmatmul.f32.gmra.mxu0 %v289
    %v334 = vpop.f32.mrf.mxu0
    %v335 = vadd.f32 %v315, %v334
    %336 = vmatmul.f32.gmra.mxu0 %v290
    %v337 = vpop.f32.mrf.mxu0
    %v338 = vadd.f32 %v315, %v337
    %339 = vmatmul.f32.gmra.mxu0 %v291
    %v340 = vpop.f32.mrf.mxu0
    %v341 = vadd.f32 %v315, %v340
    %342 = vmatmul.f32.gmra.mxu0 %v292
    %v343 = vpop.f32.mrf.mxu0
    %v344 = vadd.f32 %v315, %v343
    %345 = vmatmul.f32.gmra.mxu0 %v293
    %v346 = vpop.f32.mrf.mxu0
    %v347 = vadd.f32 %v315, %v346
    %348 = vmatmul.f32.gmra.mxu0 %v294
    %v349 = vpop.f32.mrf.mxu0
    %v350 = vadd.f32 %v315, %v349
    %351 = vmatmul.f32.gmra.mxu0 %v295
    %v352 = vpop.f32.mrf.mxu0
    %v353 = vadd.f32 %v315, %v352
    %354 = vmatmul.f32.gmra.mxu0 %v296
    %v355 = vpop.f32.mrf.mxu0
    %v356 = vadd.f32 %v315, %v355
    %357 = vdwg.mxu0
    %358 = vst [vmem:[%s7] sm:$0xff] %v335
    %359 = vst [vmem:[%s7 + $0x8] sm:$0xff] %v338
    %360 = vst [vmem:[%s7 + $0x10] sm:$0xff] %v341
    %361 = vst [vmem:[%s7 + $0x18] sm:$0xff] %v344
    %362 = vst [vmem:[%s7 + $0x20] sm:$0xff] %v347
    %363 = vst [vmem:[%s7 + $0x28] sm:$0xff] %v350
    %364 = vst [vmem:[%s7 + $0x30] sm:$0xff] %v353
    %365 = vst [vmem:[%s7 + $0x38] sm:$0xff] %v356
    // Predicated region
    $region50: #{_discriminator_forward.1} parent=1 // pred_check
      _
    $region51: #{_discriminator_forward.1} parent=1 // pred_check_branch
      %367 = sbr.rel (0) target = $region53
    $region52: #{_discriminator_forward.1} parent=1 // pred_region
      _
    $region53: #{_discriminator_forward.1} parent=1 // pred_fallthru
      _
    // Predicated region
    $region54: #{_discriminator_forward.1} parent=1 // pred_check
      _
    $region55: #{_discriminator_forward.1} parent=1 // pred_check_branch
      %369 = sbr.rel (0) target = $region57
    $region56: #{_discriminator_forward.1} parent=1 // pred_region
      _
    $region57: #{_discriminator_forward.1} parent=1 // pred_fallthru
      _
    %370 = vsyncpa [#allocation3], 1
    %371 = vsyncpa [#allocation5], 1
    %372 = vsyncpa [#allocation8], 1

// kernel: _discriminator_forward.1
$region0: #{_discriminator_forward.1}
  #allocation0 [shape = 'u32[]', space=smem, size = 0x4, offset = 0x4, fixed_abs, tag = 'smem constant byte address 0x4 - core index']
  #allocation1 [shape = 'u32[72,128]{1,0:T(1,128)}', space=vmem, size = 0x9000, scoped, tag = 'internal scratch']
  %s0 = inlined_call_operand.hbm [shape: f32[64,64], index: 0, kind: input, shape index: {}]
  %s1 = inlined_call_operand.hbm [shape: f32[64,128], index: 1, kind: input, shape index: {}]
  %s2 = inlined_call_operand.hbm [shape: f32[1,128], index: 2, kind: input, shape index: {}]
  %s3 = inlined_call_operand.hbm [shape: f32[128,128], index: 3, kind: input, shape index: {}]
  %s4 = inlined_call_operand.vmem [shape: f32[1,128], index: 4, kind: input, shape index: {}]
  %s5 = inlined_call_operand.hbm [shape: f32[128,128], index: 5, kind: input, shape index: {}]
  %s6 = inlined_call_operand.vmem [shape: f32[1,128], index: 6, kind: input, shape index: {}]
  %s7 = inlined_call_operand.vmem [shape: f32[64,128], index: 7, kind: output, shape index: {}]
  %s8 = sld [smem:[#allocation0]]
  $region58: #{_discriminator_forward.1} parent=0
    _
  %s10 = ssub.s32 1, %s8
  %s11 = scalar_select 0, %s10, %s8
  $region1: #{_discriminator_forward.1} parent=0
    #allocation2 [shape = 'u8[32768]{0}', space=vmem, size = 0x8000, scoped, tag = 'input window, operand 0, single buffered']
    #allocation3 [shape = 's32[1]{0}', space=sflag, size = 0x4, scoped, tag = 'scoped memory for _discriminator_forward.1']
    #allocation4 [shape = 'u8[32768]{0}', space=vmem, size = 0x8000, scoped, tag = 'input window, operand 1, single buffered']
    #allocation5 [shape = 's32[1]{0}', space=sflag, size = 0x4, scoped, tag = 'scoped memory for _discriminator_forward.1']
    #allocation6 [shape = 'u8[512]{0}', space=vmem, size = 0x400, scoped, tag = 'input window, operand 2, single buffered']
    #allocation7 [shape = 'u8[65536]{0}', space=vmem, size = 0x10000, scoped, tag = 'input window, operand 3, single buffered']
    #allocation8 [shape = 's32[1]{0}', space=sflag, size = 0x4, scoped, tag = 'scoped memory for _discriminator_forward.1']
    #allocation9 [shape = 'u8[65536]{0}', space=vmem, size = 0x10000, scoped, tag = 'input window, operand 5, single buffered']
    %12 = vsyncpa [#allocation3], 0
    %13 = vsyncpa [#allocation5], 0
    %14 = vsyncpa [#allocation8], 0
    // Predicated region
    $region2: #{_discriminator_forward.1} parent=1 // pred_check
      _
    $region3: #{_discriminator_forward.1} parent=1 // pred_check_branch
      %16 = sbr.rel (0) target = $region5
    $region4: #{_discriminator_forward.1} parent=1 // pred_region
      %18 = vsyncadd [#allocation3], 0
      %s19 = sshll.u32 %s0, 4
      %s20 = int_to_ptr.hbm [resolvable:$true] %s19
      %s21 = sshll.u32 [#allocation2], 4
      %s22 = int_to_ptr.vmem [resolvable:$true] %s21
      %27 = dma.hbm_to_vmem [thread:$0]  %s20, 1024, %s22, [#allocation3], 128, 128, 8
    $region5: #{_discriminator_forward.1} parent=1 // pred_fallthru
      _
    // Predicated region
    $region6: #{_discriminator_forward.1} parent=1 // pred_check
      _
    $region7: #{_discriminator_forward.1} parent=1 // pred_check_branch
      %29 = sbr.rel (0) target = $region9
    $region8: #{_discriminator_forward.1} parent=1 // pred_region
      %31 = vsyncadd [#allocation5], 0
      %s32 = sshll.u32 %s1, 4
      %s33 = int_to_ptr.hbm [resolvable:$true] %s32
      %s34 = sshll.u32 [#allocation4], 4
      %s35 = int_to_ptr.vmem [resolvable:$true] %s34
      %40 = dma.hbm_to_vmem [thread:$0]  %s33, 1024, %s35, [#allocation5], 128, 128, 8
    $region9: #{_discriminator_forward.1} parent=1 // pred_fallthru
      _
    // Predicated region
    $region10: #{_discriminator_forward.1} parent=1 // pred_check
      _
    $region11: #{_discriminator_forward.1} parent=1 // pred_check_branch
      %42 = sbr.rel (0) target = $region13
    $region12: #{_discriminator_forward.1} parent=1 // pred_region
      %44 = vsyncadd [#allocation5], 0
      %s46 = sshll.u32 %s2, 4
      %s47 = int_to_ptr.hbm [resolvable:$true] %s46
      %s48 = sshll.u32 [#allocation6], 4
      %s49 = int_to_ptr.vmem [resolvable:$true] %s48
      %51 = dma.hbm_to_vmem [thread:$0]  %s47, 16, %s49, [#allocation5]
    $region13: #{_discriminator_forward.1} parent=1 // pred_fallthru
      _
    // Predicated region
    $region14: #{_discriminator_forward.1} parent=1 // pred_check
      _
    $region15: #{_discriminator_forward.1} parent=1 // pred_check_branch
      %53 = sbr.rel (0) target = $region17
    $region16: #{_discriminator_forward.1} parent=1 // pred_region
      %55 = vsyncadd [#allocation8], 0
      %s56 = sshll.u32 %s3, 4
      %s57 = int_to_ptr.hbm [resolvable:$true] %s56
      %s58 = sshll.u32 [#allocation7], 4
      %s59 = int_to_ptr.vmem [resolvable:$true] %s58
      %64 = dma.hbm_to_vmem [thread:$0]  %s57, 2048, %s59, [#allocation8], 128, 128, 8
    $region17: #{_discriminator_forward.1} parent=1 // pred_fallthru
      _
    // Predicated region
    $region18: #{_discriminator_forward.1} parent=1 // pred_check
      _
    $region19: #{_discriminator_forward.1} parent=1 // pred_check_branch
      %66 = sbr.rel (0) target = $region21
    $region20: #{_discriminator_forward.1} parent=1 // pred_region
      _
    $region21: #{_discriminator_forward.1} parent=1 // pred_fallthru
      _
    // Predicated region
    $region22: #{_discriminator_forward.1} parent=1 // pred_check
      _
    $region23: #{_discriminator_forward.1} parent=1 // pred_check_branch
      %68 = sbr.rel (0) target = $region25
    $region24: #{_discriminator_forward.1} parent=1 // pred_region
      %70 = vsyncadd [#allocation8], 0
      %s71 = sshll.u32 %s5, 4
      %s72 = int_to_ptr.hbm [resolvable:$true] %s71
      %s73 = sshll.u32 [#allocation9], 4
      %s74 = int_to_ptr.vmem [resolvable:$true] %s73
      %79 = dma.hbm_to_vmem [thread:$0]  %s72, 2048, %s74, [#allocation8], 128, 128, 8
    $region25: #{_discriminator_forward.1} parent=1 // pred_fallthru
      _
    // Predicated region
    $region26: #{_discriminator_forward.1} parent=1 // pred_check
      _
    $region27: #{_discriminator_forward.1} parent=1 // pred_check_branch
      %81 = sbr.rel (0) target = $region29
    $region28: #{_discriminator_forward.1} parent=1 // pred_region
      _
    $region29: #{_discriminator_forward.1} parent=1 // pred_fallthru
      _
    // Predicated region
    $region30: #{_discriminator_forward.1} parent=1 // pred_check
      _
    $region31: #{_discriminator_forward.1} parent=1 // pred_check_branch
      %83 = sbr.rel (0) target = $region33
    $region32: #{_discriminator_forward.1} parent=1 // pred_region
      %85 = dma.done [#allocation3], 1024
    $region33: #{_discriminator_forward.1} parent=1 // pred_fallthru
      _
    // Predicated region
    $region34: #{_discriminator_forward.1} parent=1 // pred_check
      _
    $region35: #{_discriminator_forward.1} parent=1 // pred_check_branch
      %87 = sbr.rel (0) target = $region37
    $region36: #{_discriminator_forward.1} parent=1 // pred_region
      %89 = dma.done [#allocation5], 1024
    $region37: #{_discriminator_forward.1} parent=1 // pred_fallthru
      _
    // Predicated region
    $region38: #{_discriminator_forward.1} parent=1 // pred_check
      _
    $region39: #{_discriminator_forward.1} parent=1 // pred_check_branch
      %91 = sbr.rel (0) target = $region41
    $region40: #{_discriminator_forward.1} parent=1 // pred_region
      %93 = dma.done [#allocation5], 16
    $region41: #{_discriminator_forward.1} parent=1 // pred_fallthru
      _
    // Predicated region
    $region42: #{_discriminator_forward.1} parent=1 // pred_check
      _
    $region43: #{_discriminator_forward.1} parent=1 // pred_check_branch
      %95 = sbr.rel (0) target = $region45
    $region44: #{_discriminator_forward.1} parent=1 // pred_region
      %97 = dma.done [#allocation8], 2048
    $region45: #{_discriminator_forward.1} parent=1 // pred_fallthru
      _
    // Predicated region
    $region46: #{_discriminator_forward.1} parent=1 // pred_check
      _
    $region47: #{_discriminator_forward.1} parent=1 // pred_check_branch
      %99 = sbr.rel (0) target = $region49
    $region48: #{_discriminator_forward.1} parent=1 // pred_region
      %101 = dma.done [#allocation8], 2048
    $region49: #{_discriminator_forward.1} parent=1 // pred_fallthru
      _
    %v102 = vld [vmem:[#allocation2] sm:$0xff]
    %v103 = vld [vmem:[#allocation2 + $0x8] sm:$0xff]
    %v104 = vld [vmem:[#allocation2 + $0x10] sm:$0xff]
    %v105 = vld [vmem:[#allocation2 + $0x18] sm:$0xff]
    %v106 = vld [vmem:[#allocation2 + $0x20] sm:$0xff]
    %v107 = vld [vmem:[#allocation2 + $0x28] sm:$0xff]
    %v108 = vld [vmem:[#allocation2 + $0x30] sm:$0xff]
    %v109 = vld [vmem:[#allocation2 + $0x38] sm:$0xff]
    %v110 = vld [vmem:[#allocation4] sm:$0xff]
    %v111 = vld [vmem:[#allocation4 + $0x8] sm:$0xff]
    %v112 = vld [vmem:[#allocation4 + $0x10] sm:$0xff]
    %v113 = vld [vmem:[#allocation4 + $0x18] sm:$0xff]
    %v114 = vld [vmem:[#allocation4 + $0x20] sm:$0xff]
    %v115 = vld [vmem:[#allocation4 + $0x28] sm:$0xff]
    %v116 = vld [vmem:[#allocation4 + $0x30] sm:$0xff]
    %v117 = vld [vmem:[#allocation4 + $0x38] sm:$0xff]
    %v118 = vld [vmem:[#allocation6] sm:$0x1]
    %v120 = vperm.slane %v118, 0
    %vm122 = vcmask 523264
    %v124 = vsel %vm122, %v102, 0
    %v127 = vsel %vm122, %v103, 0
    %v130 = vsel %vm122, %v104, 0
    %v133 = vsel %vm122, %v105, 0
    %v136 = vsel %vm122, %v106, 0
    %v139 = vsel %vm122, %v107, 0
    %v142 = vsel %vm122, %v108, 0
    %v145 = vsel %vm122, %v109, 0
    %147 = vmatpush.msra.mxu0 0.0
    %148 = vmatpush.msra.mxu0 0.0
    %149 = vmatpush.msra.mxu0 0.0
    %150 = vmatpush.msra.mxu0 0.0
    %151 = vmatpush.msra.mxu0 0.0
    %152 = vmatpush.msra.mxu0 0.0
    %153 = vmatpush.msra.mxu0 0.0
    %154 = vmatpush.msra.mxu0 0.0
    %155 = vmatpush.msra.mxu0 %v117
    %156 = vmatpush.msra.mxu0 %v116
    %157 = vmatpush.msra.mxu0 %v115
    %158 = vmatpush.msra.mxu0 %v114
    %159 = vmatpush.msra.mxu0 %v113
    %160 = vmatpush.msra.mxu0 %v112
    %161 = vmatpush.msra.mxu0 %v111
    %162 = vmatpush.msra.mxu0 %v110
    %163 = vmatmul.f32.gmra.mxu0 %v124
    %v164 = vpop.f32.mrf.mxu0
    %v165 = vadd.f32 %v120, %v164
    %166 = vmatmul.f32.gmra.mxu0 %v127
    %v167 = vpop.f32.mrf.mxu0
    %v168 = vadd.f32 %v120, %v167
    %169 = vmatmul.f32.gmra.mxu0 %v130
    %v170 = vpop.f32.mrf.mxu0
    %v171 = vadd.f32 %v120, %v170
    %172 = vmatmul.f32.gmra.mxu0 %v133
    %v173 = vpop.f32.mrf.mxu0
    %v174 = vadd.f32 %v120, %v173
    %175 = vmatmul.f32.gmra.mxu0 %v136
    %v176 = vpop.f32.mrf.mxu0
    %v177 = vadd.f32 %v120, %v176
    %178 = vmatmul.f32.gmra.mxu0 %v139
    %v179 = vpop.f32.mrf.mxu0
    %v180 = vadd.f32 %v120, %v179
    %181 = vmatmul.f32.gmra.mxu0 %v142
    %v182 = vpop.f32.mrf.mxu0
    %v183 = vadd.f32 %v120, %v182
    %184 = vmatmul.f32.gmra.mxu0 %v145
    %v185 = vpop.f32.mrf.mxu0
    %v186 = vadd.f32 %v120, %v185
    %187 = vdwg.mxu0
    %vm188 = vcmp.ge.f32.partialorder %v165, 0.0
    %vm189 = vcmp.ge.f32.partialorder %v168, 0.0
    %vm190 = vcmp.ge.f32.partialorder %v171, 0.0
    %vm191 = vcmp.ge.f32.partialorder %v174, 0.0
    %vm192 = vcmp.ge.f32.partialorder %v177, 0.0
    %vm193 = vcmp.ge.f32.partialorder %v180, 0.0
    %vm194 = vcmp.ge.f32.partialorder %v183, 0.0
    %vm195 = vcmp.ge.f32.partialorder %v186, 0.0
    %v196 = vmul.f32 %v165, 0.2
    %v197 = vmul.f32 %v168, 0.2
    %v198 = vmul.f32 %v171, 0.2
    %v199 = vmul.f32 %v174, 0.2
    %v200 = vmul.f32 %v177, 0.2
    %v201 = vmul.f32 %v180, 0.2
    %v202 = vmul.f32 %v183, 0.2
    %v203 = vmul.f32 %v186, 0.2
    %v204 = vsel %vm188, %v165, %v196
    %v205 = vsel %vm189, %v168, %v197
    %v206 = vsel %vm190, %v171, %v198
    %v207 = vsel %vm191, %v174, %v199
    %v208 = vsel %vm192, %v177, %v200
    %v209 = vsel %vm193, %v180, %v201
    %v210 = vsel %vm194, %v183, %v202
    %v211 = vsel %vm195, %v186, %v203
    %v212 = vld [vmem:[#allocation7] sm:$0xff]
    %v213 = vld [vmem:[#allocation7 + $0x8] sm:$0xff]
    %v214 = vld [vmem:[#allocation7 + $0x10] sm:$0xff]
    %v215 = vld [vmem:[#allocation7 + $0x18] sm:$0xff]
    %v216 = vld [vmem:[#allocation7 + $0x20] sm:$0xff]
    %v217 = vld [vmem:[#allocation7 + $0x28] sm:$0xff]
    %v218 = vld [vmem:[#allocation7 + $0x30] sm:$0xff]
    %v219 = vld [vmem:[#allocation7 + $0x38] sm:$0xff]
    %v220 = vld [vmem:[#allocation7 + $0x40] sm:$0xff]
    %v221 = vld [vmem:[#allocation7 + $0x48] sm:$0xff]
    %v222 = vld [vmem:[#allocation7 + $0x50] sm:$0xff]
    %v223 = vld [vmem:[#allocation7 + $0x58] sm:$0xff]
    %v224 = vld [vmem:[#allocation7 + $0x60] sm:$0xff]
    %v225 = vld [vmem:[#allocation7 + $0x68] sm:$0xff]
    %v226 = vld [vmem:[#allocation7 + $0x70] sm:$0xff]
    %v227 = vld [vmem:[#allocation7 + $0x78] sm:$0xff]
    %v228 = vld [vmem:[%s4] sm:$0x1]
    %v230 = vperm.slane %v228, 0
    %232 = vmatpush.msra.mxu0 %v227
    %233 = vmatpush.msra.mxu0 %v226
    %234 = vmatpush.msra.mxu0 %v225
    %235 = vmatpush.msra.mxu0 %v224
    %236 = vmatpush.msra.mxu0 %v223
    %237 = vmatpush.msra.mxu0 %v222
    %238 = vmatpush.msra.mxu0 %v221
    %239 = vmatpush.msra.mxu0 %v220
    %240 = vmatpush.msra.mxu0 %v219
    %241 = vmatpush.msra.mxu0 %v218
    %242 = vmatpush.msra.mxu0 %v217
    %243 = vmatpush.msra.mxu0 %v216
    %244 = vmatpush.msra.mxu0 %v215
    %245 = vmatpush.msra.mxu0 %v214
    %246 = vmatpush.msra.mxu0 %v213
    %247 = vmatpush.msra.mxu0 %v212
    %248 = vmatmul.f32.gmra.mxu0 %v204
    %v249 = vpop.f32.mrf.mxu0
    %v250 = vadd.f32 %v230, %v249
    %251 = vmatmul.f32.gmra.mxu0 %v205
    %v252 = vpop.f32.mrf.mxu0
    %v253 = vadd.f32 %v230, %v252
    %254 = vmatmul.f32.gmra.mxu0 %v206
    %v255 = vpop.f32.mrf.mxu0
    %v256 = vadd.f32 %v230, %v255
    %257 = vmatmul.f32.gmra.mxu0 %v207
    %v258 = vpop.f32.mrf.mxu0
    %v259 = vadd.f32 %v230, %v258
    %260 = vmatmul.f32.gmra.mxu0 %v208
    %v261 = vpop.f32.mrf.mxu0
    %v262 = vadd.f32 %v230, %v261
    %263 = vmatmul.f32.gmra.mxu0 %v209
    %v264 = vpop.f32.mrf.mxu0
    %v265 = vadd.f32 %v230, %v264
    %266 = vmatmul.f32.gmra.mxu0 %v210
    %v267 = vpop.f32.mrf.mxu0
    %v268 = vadd.f32 %v230, %v267
    %269 = vmatmul.f32.gmra.mxu0 %v211
    %v270 = vpop.f32.mrf.mxu0
    %v271 = vadd.f32 %v230, %v270
    %272 = vdwg.mxu0
    %vm273 = vcmp.ge.f32.partialorder %v250, 0.0
    %vm274 = vcmp.ge.f32.partialorder %v253, 0.0
    %vm275 = vcmp.ge.f32.partialorder %v256, 0.0
    %vm276 = vcmp.ge.f32.partialorder %v259, 0.0
    %vm277 = vcmp.ge.f32.partialorder %v262, 0.0
    %vm278 = vcmp.ge.f32.partialorder %v265, 0.0
    %vm279 = vcmp.ge.f32.partialorder %v268, 0.0
    %vm280 = vcmp.ge.f32.partialorder %v271, 0.0
    %v281 = vmul.f32 %v250, 0.2
    %v282 = vmul.f32 %v253, 0.2
    %v283 = vmul.f32 %v256, 0.2
    %v284 = vmul.f32 %v259, 0.2
    %v285 = vmul.f32 %v262, 0.2
    %v286 = vmul.f32 %v265, 0.2
    %v287 = vmul.f32 %v268, 0.2
    %v288 = vmul.f32 %v271, 0.2
    %v289 = vsel %vm273, %v250, %v281
    %v290 = vsel %vm274, %v253, %v282
    %v291 = vsel %vm275, %v256, %v283
    %v292 = vsel %vm276, %v259, %v284
    %v293 = vsel %vm277, %v262, %v285
    %v294 = vsel %vm278, %v265, %v286
    %v295 = vsel %vm279, %v268, %v287
    %v296 = vsel %vm280, %v271, %v288
    %v297 = vld [vmem:[#allocation9] sm:$0xff]
    %v298 = vld [vmem:[#allocation9 + $0x8] sm:$0xff]
    %v299 = vld [vmem:[#allocation9 + $0x10] sm:$0xff]
    %v300 = vld [vmem:[#allocation9 + $0x18] sm:$0xff]
    %v301 = vld [vmem:[#allocation9 + $0x20] sm:$0xff]
    %v302 = vld [vmem:[#allocation9 + $0x28] sm:$0xff]
    %v303 = vld [vmem:[#allocation9 + $0x30] sm:$0xff]
    %v304 = vld [vmem:[#allocation9 + $0x38] sm:$0xff]
    %v305 = vld [vmem:[#allocation9 + $0x40] sm:$0xff]
    %v306 = vld [vmem:[#allocation9 + $0x48] sm:$0xff]
    %v307 = vld [vmem:[#allocation9 + $0x50] sm:$0xff]
    %v308 = vld [vmem:[#allocation9 + $0x58] sm:$0xff]
    %v309 = vld [vmem:[#allocation9 + $0x60] sm:$0xff]
    %v310 = vld [vmem:[#allocation9 + $0x68] sm:$0xff]
    %v311 = vld [vmem:[#allocation9 + $0x70] sm:$0xff]
    %v312 = vld [vmem:[#allocation9 + $0x78] sm:$0xff]
    %v313 = vld [vmem:[%s6] sm:$0x1]
    %v315 = vperm.slane %v313, 0
    %317 = vmatpush.msra.mxu0 %v312
    %318 = vmatpush.msra.mxu0 %v311
    %319 = vmatpush.msra.mxu0 %v310
    %320 = vmatpush.msra.mxu0 %v309
    %321 = vmatpush.msra.mxu0 %v308
    %322 = vmatpush.msra.mxu0 %v307
    %323 = vmatpush.msra.mxu0 %v306
    %324 = vmatpush.msra.mxu0 %v305
    %325 = vmatpush.msra.mxu0 %v304
    %326 = vmatpush.msra.mxu0 %v303
    %327 = vmatpush.msra.mxu0 %v302
    %328 = vmatpush.msra.mxu0 %v301
    %329 = vmatpush.msra.mxu0 %v300
    %330 = vmatpush.msra.mxu0 %v299
    %331 = vmatpush.msra.mxu0 %v298
    %332 = vmatpush.msra.mxu0 %v297
    %333 = vmatmul.f32.gmra.mxu0 %v289
    %v334 = vpop.f32.mrf.mxu0
    %v335 = vadd.f32 %v315, %v334
    %336 = vmatmul.f32.gmra.mxu0 %v290
    %v337 = vpop.f32.mrf.mxu0
    %v338 = vadd.f32 %v315, %v337
    %339 = vmatmul.f32.gmra.mxu0 %v291
    %v340 = vpop.f32.mrf.mxu0
    %v341 = vadd.f32 %v315, %v340
    %342 = vmatmul.f32.gmra.mxu0 %v292
    %v343 = vpop.f32.mrf.mxu0
    %v344 = vadd.f32 %v315, %v343
    %345 = vmatmul.f32.gmra.mxu0 %v293
    %v346 = vpop.f32.mrf.mxu0
    %v347 = vadd.f32 %v315, %v346
    %348 = vmatmul.f32.gmra.mxu0 %v294
    %v349 = vpop.f32.mrf.mxu0
    %v350 = vadd.f32 %v315, %v349
    %351 = vmatmul.f32.gmra.mxu0 %v295
    %v352 = vpop.f32.mrf.mxu0
    %v353 = vadd.f32 %v315, %v352
    %354 = vmatmul.f32.gmra.mxu0 %v296
    %v355 = vpop.f32.mrf.mxu0
    %v356 = vadd.f32 %v315, %v355
    %357 = vdwg.mxu0
    %358 = vst [vmem:[%s7] sm:$0xff] %v335
    %359 = vst [vmem:[%s7 + $0x8] sm:$0xff] %v338
    %360 = vst [vmem:[%s7 + $0x10] sm:$0xff] %v341
    %361 = vst [vmem:[%s7 + $0x18] sm:$0xff] %v344
    %362 = vst [vmem:[%s7 + $0x20] sm:$0xff] %v347
    %363 = vst [vmem:[%s7 + $0x28] sm:$0xff] %v350
    %364 = vst [vmem:[%s7 + $0x30] sm:$0xff] %v353
    %365 = vst [vmem:[%s7 + $0x38] sm:$0xff] %v356
    // Predicated region
    $region50: #{_discriminator_forward.1} parent=1 // pred_check
      _
    $region51: #{_discriminator_forward.1} parent=1 // pred_check_branch
      %367 = sbr.rel (0) target = $region53
    $region52: #{_discriminator_forward.1} parent=1 // pred_region
      _
    $region53: #{_discriminator_forward.1} parent=1 // pred_fallthru
      _
    // Predicated region
    $region54: #{_discriminator_forward.1} parent=1 // pred_check
      _
    $region55: #{_discriminator_forward.1} parent=1 // pred_check_branch
      %369 = sbr.rel (0) target = $region57
    $region56: #{_discriminator_forward.1} parent=1 // pred_region
      _
    $region57: #{_discriminator_forward.1} parent=1 // pred_fallthru
      _
    %370 = vsyncpa [#allocation3], 1
    %371 = vsyncpa [#allocation5], 1
    %372 = vsyncpa [#allocation8], 1

</llo_original>
